<compile_context>
chip_gen: v6e
topology: v6e:2x2x1
jax: 0.10.0
libtpu: 0.0.40
codegen_flags: <defaults>
</compile_context>

<pallas_src>
import functools

import jax
import jax.numpy as jnp
from jax.experimental import pallas as pl
from jax.experimental.pallas import tpu as pltpu

F_IN = 14 * 14       # 196 flattened input features (== full last dim -> legal block)
H = 128              # hidden width
LATENT = 8           # mu / log_var each 8 wide -> h2 is 16 wide


# ----------------------------- Pallas kernel --------------------------------
def vae_forward_kernel(
    x_ref,        # (TB, 196) f32 flattened input rows (cast to bf16 in-kernel)
    eps_ref,      # (TB, 8)   f32 reparameterization noise
    w_e1_ref,     # (196, 128) bf16 encoder_fc1 weight (transposed)
    w_e2_ref,     # (128, 16)  f32  encoder_fc2 weight (transposed) -- kept f32
    w_d1_ref,     # (8, 128)   bf16 decoder_fc1 weight (transposed)
    w_d2_ref,     # (128, 196) bf16 decoder_fc2 weight (transposed)
    bias_ref,     # (4, 196)   f32 packed biases [b_e1 | b_e2 | b_d1 | b_d2]
    recon_ref,    # out: (TB, 196) f32
    latent_ref,   # out: (TB, 16)  f32 = [mu | log_var]
):
    f32 = jnp.float32
    bf16 = jnp.bfloat16

    # ---- encode ----
    x = x_ref[...].astype(bf16)                       # in-kernel cast (no wrapper pass)
    h1 = jnp.tanh(
        jnp.dot(x, w_e1_ref[...], preferred_element_type=f32) + bias_ref[0:1, :H]
    )
    # encoder_fc2 kept f32 end-to-end: ~1.5% of FLOPs, hidden under DMA,
    # tightens mu / log_var which feed exp(0.5 * log_var).
    h2 = (
        jnp.dot(h1, w_e2_ref[...], preferred_element_type=f32)
        + bias_ref[1:2, : 2 * LATENT]
    )
    mu = h2[:, :LATENT]
    log_var = h2[:, LATENT:]

    # ---- reparameterize (f32 on the VPU/EUP path) ----
    z = mu + eps_ref[...] * jnp.exp(0.5 * log_var)

    # ---- decode ----
    h3 = jnp.tanh(
        jnp.dot(z.astype(bf16), w_d1_ref[...], preferred_element_type=f32)
        + bias_ref[2:3, :H]
    )
    h4 = jax.nn.sigmoid(
        jnp.dot(h3.astype(bf16), w_d2_ref[...], preferred_element_type=f32)
        + bias_ref[3:4, :]
    )

    recon_ref[...] = h4
    latent_ref[...] = h2


# ------------------------------ JAX wrapper ---------------------------------
def _prepare_kernel_params(params):
    """Cast the f32 (in, out)-transposed Linear params for the kernel (no padding)."""
    (w_e1, b_e1), (w_e2, b_e2), (w_d1, b_d1), (w_d2, b_d2) = params
    w_e1_p = w_e1.astype(jnp.bfloat16)                       # (196, 128)
    w_e2_p = w_e2.astype(jnp.float32)                        # (128, 16)  stays f32
    w_d1_p = w_d1.astype(jnp.bfloat16)                       # (8, 128)
    w_d2_p = w_d2.astype(jnp.bfloat16)                       # (128, 196)

    def pad_bias(b):
        return jnp.pad(b, ((0, 0), (0, F_IN - b.shape[1])))

    bias_pack = jnp.concatenate(
        [pad_bias(b_e1), pad_bias(b_e2), pad_bias(b_d1), pad_bias(b_d2)], axis=0
    ).astype(jnp.float32)                                    # (4, 196)
    return w_e1_p, w_e2_p, w_d1_p, w_d2_p, bias_pack


def _round_up(n, m):
    return (n + m - 1) // m * m


def _choose_tb(B, block_rows):
    """Batch tile: multiple of 8 rows; >= 2 grid steps when B allows, so both
    v7x TensorCores get work and DMA overlaps compute."""
    if B <= 8 or (B % 8 != 0 and B <= block_rows):
        return B                                   # single full-array block (always legal)
    tb = min(block_rows, _round_up(pl.cdiv(B, 2), 8))
    return max(8, tb)


@functools.partial(jax.jit, static_argnames=("block_rows",))
def vae_forward(x_nchw, eps, params, *, block_rows=2048):
    """x_nchw: (B, 1, 14, 14) float32; eps: (B, 8) float32."""
    B = x_nchw.shape[0]
    x_flat = x_nchw.reshape(B, F_IN)               # == torch x.view(-1, 196); free reshape

    w_e1_p, w_e2_p, w_d1_p, w_d2_p, bias_pack = _prepare_kernel_params(params)

    tb = _choose_tb(B, block_rows)
    grid = (pl.cdiv(B, tb),)

    def row(width):                                 # row-tiled along batch
        return pl.BlockSpec((tb, width), lambda i: (i, 0))

    def pinned(shape):                              # VMEM-resident across grid steps
        return pl.BlockSpec(shape, lambda i: (0, 0))

    # Scoped-VMEM estimate for the double-buffered row tiles (eps/latent tiles
    # lane-pad to 128 in VMEM) + weights margin.  Only raise the limit if we
    # exceed v5e's 16 MiB default; v6e/v7x defaults (32 MiB) are higher.
    row_tile_bytes = 4 * (F_IN + 128 + F_IN + 128)
    est = 2 * tb * row_tile_bytes + (2 << 20)
    vmem_limit = int(min(est * 5 // 4, 96 << 20)) if est > (14 << 20) else None

    recon_flat, latent = pl.pallas_call(
        vae_forward_kernel,
        out_shape=(
            jax.ShapeDtypeStruct((B, F_IN), jnp.float32),
            jax.ShapeDtypeStruct((B, 2 * LATENT), jnp.float32),
        ),
        grid=grid,
        in_specs=[
            row(F_IN),                      # x (f32, unpadded)
            row(LATENT),                    # eps
            pinned((F_IN, H)),              # w_e1 (bf16)
            pinned((H, 2 * LATENT)),        # w_e2 (f32)
            pinned((LATENT, H)),            # w_d1 (bf16)
            pinned((H, F_IN)),              # w_d2 (bf16)
            pinned((4, F_IN)),              # packed biases (f32)
        ],
        out_specs=(row(F_IN), row(2 * LATENT)),
        compiler_params=pltpu.CompilerParams(
            dimension_semantics=("parallel",),
            vmem_limit_bytes=vmem_limit),
    )(x_flat, eps, w_e1_p, w_e2_p, w_d1_p, w_d2_p, bias_pack)

    recon = recon_flat.reshape(B, 1, 14, 14)        # free bitcast-reshape
    mu = latent[:, :LATENT]
    log_var = latent[:, LATENT:]
    return recon, mu, log_var


# ------------------------- deterministic parameters --------------------------
def init_linear(key, fan_in, fan_out):
    """nn.Linear default init: U(-1/sqrt(fan_in), 1/sqrt(fan_in)).
    Weight returned pre-transposed as (fan_in, fan_out)."""
    kw, kb = jax.random.split(key)
    bound = 1.0 / jnp.sqrt(float(fan_in))
    w = jax.random.uniform(kw, (fan_in, fan_out), jnp.float32, -bound, bound)
    b = jax.random.uniform(kb, (1, fan_out), jnp.float32, -bound, bound)
    return w, b


def make_params(key):
    k1, k2, k3, k4 = jax.random.split(key, 4)
    return (
        init_linear(k1, F_IN, 128),    # encoder_fc1
        init_linear(k2, 128, 16),      # encoder_fc2
        init_linear(k3, 8, 128),       # decoder_fc1
        init_linear(k4, 128, F_IN),    # decoder_fc2
    )


# ------------------------------- reference ----------------------------------
def vae_forward_ref(x_nchw, eps, params):
    B = x_nchw.shape[0]
    x = x_nchw.reshape(B, F_IN)
    (w_e1, b_e1), (w_e2, b_e2), (w_d1, b_d1), (w_d2, b_d2) = params
    h1 = jnp.tanh(x @ w_e1 + b_e1)
    h2 = h1 @ w_e2 + b_e2
    mu, log_var = h2[:, :LATENT], h2[:, LATENT:]
    z = mu + eps * jnp.exp(0.5 * log_var)
    h3 = jnp.tanh(z @ w_d1 + b_d1)
    h4 = jax.nn.sigmoid(h3 @ w_d2 + b_d2)
    return h4.reshape(B, 1, 14, 14), mu, log_var


if __name__ == "__main__":
    key = jax.random.PRNGKey(0)
    k_params, k_x, k_eps = jax.random.split(key, 3)
    params = make_params(k_params)

    # small single-block batch, plus a multi-step / ragged grid to exercise masking
    for B in (8, 24):
        kx = jax.random.fold_in(k_x, B)
        ke = jax.random.fold_in(k_eps, B)
        x = jax.random.uniform(kx, (B, 1, 14, 14), jnp.float32)   # NCHW, like MNIST crops
        eps = jax.random.normal(ke, (B, LATENT), jnp.float32)     # torch.randn_like(std)

        recon, mu, log_var = vae_forward(x, eps, params)
        jax.block_until_ready((recon, mu, log_var))

        # sanity check against a pure-JAX f32 reference (bf16 matmuls -> loose tol)
        recon_r, mu_r, lv_r = vae_forward_ref(x, eps, params)
        assert recon.shape == (B, 1, 14, 14) and mu.shape == (B, LATENT) and log_var.shape == (B, LATENT)
        assert jnp.allclose(recon, recon_r, atol=2e-2)
        assert jnp.allclose(mu, mu_r, atol=2e-2)
        assert jnp.allclose(log_var, lv_r, atol=2e-2)

    print("KERNEL_OK")
</pallas_src>

<mosaic_0001>
module attributes {stable_mosaic.version = 11 : i64} {
  func.func @vae_forward_kernel(%arg0: i32, %arg1: memref<8x196xf32, #tpu.memory_space<vmem>>, %arg2: memref<8x8xf32, #tpu.memory_space<vmem>>, %arg3: memref<196x128xbf16, #tpu.memory_space<vmem>>, %arg4: memref<128x16xf32, #tpu.memory_space<vmem>>, %arg5: memref<8x128xbf16, #tpu.memory_space<vmem>>, %arg6: memref<128x196xbf16, #tpu.memory_space<vmem>>, %arg7: memref<4x196xf32, #tpu.memory_space<vmem>>, %arg8: memref<8x196xf32, #tpu.memory_space<vmem>>, %arg9: memref<8x16xf32, #tpu.memory_space<vmem>>) attributes {dimension_semantics = [#tpu.dimension_semantics<parallel>], iteration_bounds = array<i64: 1>, scalar_prefetch = 0 : i64, scratch_operands = 0 : i64, tpu.core_type = #tpu.core_type<tc>, window_params = [{transform_indices = @transform_0, window_bounds = array<i64: 8, 196>}, {transform_indices = @transform_1, window_bounds = array<i64: 8, 8>}, {pipeline_mode = #tpu.pipeline_mode<synchronous>, transform_indices = @transform_2, window_bounds = array<i64: 196, 128>}, {pipeline_mode = #tpu.pipeline_mode<synchronous>, transform_indices = @transform_3, window_bounds = array<i64: 128, 16>}, {pipeline_mode = #tpu.pipeline_mode<synchronous>, transform_indices = @transform_4, window_bounds = array<i64: 8, 128>}, {pipeline_mode = #tpu.pipeline_mode<synchronous>, transform_indices = @transform_5, window_bounds = array<i64: 128, 196>}, {pipeline_mode = #tpu.pipeline_mode<synchronous>, transform_indices = @transform_6, window_bounds = array<i64: 4, 196>}, {transform_indices = @transform_7, window_bounds = array<i64: 8, 196>}, {transform_indices = @transform_8, window_bounds = array<i64: 8, 16>}]} {
    %c0 = arith.constant 0 : index
    %c0_0 = arith.constant 0 : index
    %0 = vector.load %arg1[%c0, %c0_0] : memref<8x196xf32, #tpu.memory_space<vmem>>, vector<8x196xf32>
    %1 = arith.truncf %0 : vector<8x196xf32> to vector<8x196xbf16>
    %c0_1 = arith.constant 0 : index
    %c0_2 = arith.constant 0 : index
    %2 = vector.load %arg3[%c0_1, %c0_2] : memref<196x128xbf16, #tpu.memory_space<vmem>>, vector<196x128xbf16>
    %cst = arith.constant dense<0.000000e+00> : vector<8x128xf32>
    %3 = tpu.matmul %1, %2, %cst {dimension_numbers = #tpu.dot_dimension_numbers<[1], [0], [0], [1], [0, 0, 1, 1], [], []>} : vector<8x196xbf16>, vector<196x128xbf16>, vector<8x128xf32> -> vector<8x128xf32>
    %c0_3 = arith.constant 0 : index
    %c0_4 = arith.constant 0 : index
    %4 = vector.load %arg7[%c0_3, %c0_4] : memref<4x196xf32, #tpu.memory_space<vmem>>, vector<1x128xf32>
    %5 = vector.broadcast %4 : vector<1x128xf32> to vector<8x128xf32>
    %6 = arith.addf %3, %5 : vector<8x128xf32>
    %7 = math.tanh %6 : vector<8x128xf32>
    %c0_5 = arith.constant 0 : index
    %c0_6 = arith.constant 0 : index
    %8 = vector.load %arg4[%c0_5, %c0_6] : memref<128x16xf32, #tpu.memory_space<vmem>>, vector<128x16xf32>
    %cst_7 = arith.constant dense<0.000000e+00> : vector<8x16xf32>
    %9 = tpu.matmul %7, %8, %cst_7 {dimension_numbers = #tpu.dot_dimension_numbers<[1], [0], [0], [1], [0, 0, 1, 1], [], []>} : vector<8x128xf32>, vector<128x16xf32>, vector<8x16xf32> -> vector<8x16xf32>
    %c1 = arith.constant 1 : index
    %c0_8 = arith.constant 0 : index
    %10 = vector.load %arg7[%c1, %c0_8] : memref<4x196xf32, #tpu.memory_space<vmem>>, vector<1x16xf32>
    %11 = vector.broadcast %10 : vector<1x16xf32> to vector<8x16xf32>
    %12 = arith.addf %9, %11 : vector<8x16xf32>
    %13 = vector.extract_strided_slice %12 {offsets = [0, 0], sizes = [8, 8], strides = [1, 1]} : vector<8x16xf32> to vector<8x8xf32>
    %14 = vector.extract_strided_slice %12 {offsets = [0, 8], sizes = [8, 8], strides = [1, 1]} : vector<8x16xf32> to vector<8x8xf32>
    %c0_9 = arith.constant 0 : index
    %c0_10 = arith.constant 0 : index
    %15 = vector.load %arg2[%c0_9, %c0_10] : memref<8x8xf32, #tpu.memory_space<vmem>>, vector<8x8xf32>
    %cst_11 = arith.constant 5.000000e-01 : f32
    %16 = vector.broadcast %cst_11 : f32 to vector<8x8xf32>
    %17 = arith.mulf %16, %14 : vector<8x8xf32>
    %18 = math.exp %17 : vector<8x8xf32>
    %19 = arith.mulf %15, %18 : vector<8x8xf32>
    %20 = arith.addf %13, %19 : vector<8x8xf32>
    %21 = arith.truncf %20 : vector<8x8xf32> to vector<8x8xbf16>
    %c0_12 = arith.constant 0 : index
    %c0_13 = arith.constant 0 : index
    %22 = vector.load %arg5[%c0_12, %c0_13] : memref<8x128xbf16, #tpu.memory_space<vmem>>, vector<8x128xbf16>
    %cst_14 = arith.constant dense<0.000000e+00> : vector<8x128xf32>
    %23 = tpu.matmul %21, %22, %cst_14 {dimension_numbers = #tpu.dot_dimension_numbers<[1], [0], [0], [1], [0, 0, 1, 1], [], []>} : vector<8x8xbf16>, vector<8x128xbf16>, vector<8x128xf32> -> vector<8x128xf32>
    %c2 = arith.constant 2 : index
    %c0_15 = arith.constant 0 : index
    %24 = vector.load %arg7[%c2, %c0_15] : memref<4x196xf32, #tpu.memory_space<vmem>>, vector<1x128xf32>
    %25 = vector.broadcast %24 : vector<1x128xf32> to vector<8x128xf32>
    %26 = arith.addf %23, %25 : vector<8x128xf32>
    %27 = math.tanh %26 : vector<8x128xf32>
    %28 = arith.truncf %27 : vector<8x128xf32> to vector<8x128xbf16>
    %c0_16 = arith.constant 0 : index
    %c0_17 = arith.constant 0 : index
    %29 = vector.load %arg6[%c0_16, %c0_17] : memref<128x196xbf16, #tpu.memory_space<vmem>>, vector<128x196xbf16>
    %cst_18 = arith.constant dense<0.000000e+00> : vector<8x196xf32>
    %30 = tpu.matmul %28, %29, %cst_18 {dimension_numbers = #tpu.dot_dimension_numbers<[1], [0], [0], [1], [0, 0, 1, 1], [], []>} : vector<8x128xbf16>, vector<128x196xbf16>, vector<8x196xf32> -> vector<8x196xf32>
    %c3 = arith.constant 3 : index
    %c0_19 = arith.constant 0 : index
    %31 = vector.load %arg7[%c3, %c0_19] : memref<4x196xf32, #tpu.memory_space<vmem>>, vector<1x196xf32>
    %32 = vector.broadcast %31 : vector<1x196xf32> to vector<8x196xf32>
    %33 = arith.addf %30, %32 : vector<8x196xf32>
    %34 = arith.negf %33 : vector<8x196xf32>
    %35 = math.exp %34 : vector<8x196xf32>
    %cst_20 = arith.constant 1.000000e+00 : f32
    %36 = vector.broadcast %cst_20 : f32 to vector<8x196xf32>
    %37 = arith.addf %36, %35 : vector<8x196xf32>
    %38 = arith.divf %36, %37 : vector<8x196xf32>
    %c0_21 = arith.constant 0 : index
    %c0_22 = arith.constant 0 : index
    %39 = vector.load %arg8[%c0_21, %c0_22] : memref<8x196xf32, #tpu.memory_space<vmem>>, vector<8x196xf32>
    tpu.vector_store %arg8[%c0_21, %c0_22], %38 {strides = array<i32>} : memref<8x196xf32, #tpu.memory_space<vmem>>, vector<8x196xf32>,
    %c0_23 = arith.constant 0 : index
    %c0_24 = arith.constant 0 : index
    %40 = vector.load %arg9[%c0_23, %c0_24] : memref<8x16xf32, #tpu.memory_space<vmem>>, vector<8x16xf32>
    tpu.vector_store %arg9[%c0_23, %c0_24], %12 {strides = array<i32>} : memref<8x16xf32, #tpu.memory_space<vmem>>, vector<8x16xf32>,
    return
  }
  func.func @transform_0(%arg0: i32) -> (i32, i32) {
    %c0_i32 = arith.constant 0 : i32
    %c0_i32_0 = arith.constant 0 : i32
    return %arg0, %c0_i32 : i32, i32
  }
  func.func @transform_1(%arg0: i32) -> (i32, i32) {
    %c0_i32 = arith.constant 0 : i32
    %c0_i32_0 = arith.constant 0 : i32
    return %arg0, %c0_i32 : i32, i32
  }
  func.func @transform_2(%arg0: i32) -> (i32, i32) {
    %c0_i32 = arith.constant 0 : i32
    %c0_i32_0 = arith.constant 0 : i32
    %c0_i32_1 = arith.constant 0 : i32
    return %c0_i32, %c0_i32_0 : i32, i32
  }
  func.func @transform_3(%arg0: i32) -> (i32, i32) {
    %c0_i32 = arith.constant 0 : i32
    %c0_i32_0 = arith.constant 0 : i32
    %c0_i32_1 = arith.constant 0 : i32
    return %c0_i32, %c0_i32_0 : i32, i32
  }
  func.func @transform_4(%arg0: i32) -> (i32, i32) {
    %c0_i32 = arith.constant 0 : i32
    %c0_i32_0 = arith.constant 0 : i32
    %c0_i32_1 = arith.constant 0 : i32
    return %c0_i32, %c0_i32_0 : i32, i32
  }
  func.func @transform_5(%arg0: i32) -> (i32, i32) {
    %c0_i32 = arith.constant 0 : i32
    %c0_i32_0 = arith.constant 0 : i32
    %c0_i32_1 = arith.constant 0 : i32
    return %c0_i32, %c0_i32_0 : i32, i32
  }
  func.func @transform_6(%arg0: i32) -> (i32, i32) {
    %c0_i32 = arith.constant 0 : i32
    %c0_i32_0 = arith.constant 0 : i32
    %c0_i32_1 = arith.constant 0 : i32
    return %c0_i32, %c0_i32_0 : i32, i32
  }
  func.func @transform_7(%arg0: i32) -> (i32, i32) {
    %c0_i32 = arith.constant 0 : i32
    %c0_i32_0 = arith.constant 0 : i32
    return %arg0, %c0_i32 : i32, i32
  }
  func.func @transform_8(%arg0: i32) -> (i32, i32) {
    %c0_i32 = arith.constant 0 : i32
    %c0_i32_0 = arith.constant 0 : i32
    return %arg0, %c0_i32 : i32, i32
  }
}

</mosaic_0001>

<llo_original>
// kernel: vae_forward.1
$region0: #{vae_forward.1}
  #allocation0 [shape = 'u32[]', space=smem, size = 0x4, offset = 0x4, fixed_abs, tag = 'smem constant byte address 0x4 - core index']
  #allocation1 [shape = 'u32[144,128]{1,0:T(1,128)}', space=vmem, size = 0x12000, scoped, tag = 'internal scratch']
  %s0 = inlined_call_operand.vmem [shape: f32[8,196], index: 0, kind: input, shape index: {}]
  %s1 = inlined_call_operand.vmem [shape: f32[8,8], index: 1, kind: input, shape index: {}]
  %s2 = inlined_call_operand.vmem [shape: bf16[196,128], index: 2, kind: input, shape index: {}]
  %s3 = inlined_call_operand.vmem [shape: f32[128,16], index: 3, kind: input, shape index: {}]
  %s4 = inlined_call_operand.vmem [shape: bf16[8,128], index: 4, kind: input, shape index: {}]
  %s5 = inlined_call_operand.vmem [shape: bf16[128,196], index: 5, kind: input, shape index: {}]
  %s6 = inlined_call_operand.vmem [shape: f32[4,196], index: 6, kind: input, shape index: {}]
  %s7 = inlined_call_operand.vmem [shape: f32[8,196], index: 7, kind: output, shape index: {0}]
  %s8 = inlined_call_operand.vmem [shape: f32[8,16], index: 8, kind: output, shape index: {1}]
  %9 = xla_tuple %s7, %s8
  %s10 = sld [smem:[#allocation0]]
  $region46: #{vae_forward.1} parent=0
    _
  %s12 = ssub.s32 1, %s10
  %s13 = scalar_select 0, %s12, %s10
  // Predicated region
  $region2: #{vae_forward.1} parent=0 // pred_check
    _
  $region3: #{vae_forward.1} parent=0 // pred_check_branch
    %15 = sbr.rel (0) target = $region5
  $region4: #{vae_forward.1} parent=0 // pred_region
    _
  $region5: #{vae_forward.1} parent=0 // pred_fallthru
    _
  // Predicated region
  $region6: #{vae_forward.1} parent=0 // pred_check
    _
  $region7: #{vae_forward.1} parent=0 // pred_check_branch
    %17 = sbr.rel (0) target = $region9
  $region8: #{vae_forward.1} parent=0 // pred_region
    _
  $region9: #{vae_forward.1} parent=0 // pred_fallthru
    _
  // Predicated region
  $region10: #{vae_forward.1} parent=0 // pred_check
    _
  $region11: #{vae_forward.1} parent=0 // pred_check_branch
    %19 = sbr.rel (0) target = $region13
  $region12: #{vae_forward.1} parent=0 // pred_region
    _
  $region13: #{vae_forward.1} parent=0 // pred_fallthru
    _
  // Predicated region
  $region14: #{vae_forward.1} parent=0 // pred_check
    _
  $region15: #{vae_forward.1} parent=0 // pred_check_branch
    %21 = sbr.rel (0) target = $region17
  $region16: #{vae_forward.1} parent=0 // pred_region
    _
  $region17: #{vae_forward.1} parent=0 // pred_fallthru
    _
  // Predicated region
  $region18: #{vae_forward.1} parent=0 // pred_check
    _
  $region19: #{vae_forward.1} parent=0 // pred_check_branch
    %23 = sbr.rel (0) target = $region21
  $region20: #{vae_forward.1} parent=0 // pred_region
    _
  $region21: #{vae_forward.1} parent=0 // pred_fallthru
    _
  // Predicated region
  $region22: #{vae_forward.1} parent=0 // pred_check
    _
  $region23: #{vae_forward.1} parent=0 // pred_check_branch
    %25 = sbr.rel (0) target = $region25
  $region24: #{vae_forward.1} parent=0 // pred_region
    _
  $region25: #{vae_forward.1} parent=0 // pred_fallthru
    _
  // Predicated region
  $region26: #{vae_forward.1} parent=0 // pred_check
    _
  $region27: #{vae_forward.1} parent=0 // pred_check_branch
    %27 = sbr.rel (0) target = $region29
  $region28: #{vae_forward.1} parent=0 // pred_region
    _
  $region29: #{vae_forward.1} parent=0 // pred_fallthru
    _
  %v29 = vld [vmem:[%s0] sm:$0xff]
  %v30 = vld [vmem:[%s0 + $0x8] sm:$0xff]
  %v31 = vpack.c.bf16 %v29, %v29
  %v32 = vpack.c.bf16 %v30, %v30
  %v33 = vld [vmem:[%s2] sm:$0xf]
  %v34 = vld [vmem:[%s2 + $0x4] sm:$0xf]
  %v35 = vld [vmem:[%s2 + $0x8] sm:$0xf]
  %v36 = vld [vmem:[%s2 + $0xc] sm:$0xf]
  %v37 = vld [vmem:[%s2 + $0x10] sm:$0xf]
  %v38 = vld [vmem:[%s2 + $0x14] sm:$0xf]
  %v39 = vld [vmem:[%s2 + $0x18] sm:$0xf]
  %v40 = vld [vmem:[%s2 + $0x1c] sm:$0xf]
  %v41 = vld [vmem:[%s2 + $0x20] sm:$0xf]
  %v42 = vld [vmem:[%s2 + $0x24] sm:$0xf]
  %v43 = vld [vmem:[%s2 + $0x28] sm:$0xf]
  %v44 = vld [vmem:[%s2 + $0x2c] sm:$0xf]
  %v45 = vld [vmem:[%s2 + $0x30] sm:$0xf]
  %v46 = vld [vmem:[%s2 + $0x34] sm:$0xf]
  %v47 = vld [vmem:[%s2 + $0x38] sm:$0xf]
  %v48 = vld [vmem:[%s2 + $0x3c] sm:$0xf]
  %v49 = vld [vmem:[%s2 + $0x40] sm:$0xf]
  %v50 = vld [vmem:[%s2 + $0x44] sm:$0xf]
  %v51 = vld [vmem:[%s2 + $0x48] sm:$0xf]
  %v52 = vld [vmem:[%s2 + $0x4c] sm:$0xf]
  %v53 = vld [vmem:[%s2 + $0x50] sm:$0xf]
  %v54 = vld [vmem:[%s2 + $0x54] sm:$0xf]
  %v55 = vld [vmem:[%s2 + $0x58] sm:$0xf]
  %v56 = vld [vmem:[%s2 + $0x5c] sm:$0xf]
  %v57 = vld [vmem:[%s2 + $0x60] sm:$0x3]
  %v58 = vld [vmem:[%s6] sm:$0x1]
  %v59 = vlaneseq
  %v60 = vshrl.u32 %v59, 7
  %v61 = vsub.s32 0, %v60
  %v62 = vrot.slane %v58, %v61
  %v88 = vunpack.c.l.b16 %v33
  %v89 = vunpack.c.l.b16 %v34
  %v90 = vunpack.c.l.b16 %v35
  %v91 = vunpack.c.l.b16 %v36
  %v92 = vunpack.c.l.b16 %v37
  %v93 = vunpack.c.l.b16 %v38
  %v94 = vunpack.c.l.b16 %v39
  %v95 = vunpack.c.l.b16 %v40
  %v96 = vunpack.c.l.b16 %v41
  %v97 = vunpack.c.l.b16 %v42
  %v98 = vunpack.c.l.b16 %v43
  %v99 = vunpack.c.l.b16 %v44
  %v100 = vunpack.c.l.b16 %v45
  %v101 = vunpack.c.l.b16 %v46
  %v102 = vunpack.c.l.b16 %v47
  %v103 = vunpack.c.l.b16 %v48
  %v104 = vunpack.c.l.b16 %v49
  %v105 = vunpack.c.l.b16 %v50
  %v106 = vunpack.c.l.b16 %v51
  %v107 = vunpack.c.l.b16 %v52
  %v108 = vunpack.c.l.b16 %v53
  %v109 = vunpack.c.l.b16 %v54
  %v110 = vunpack.c.l.b16 %v55
  %v111 = vunpack.c.l.b16 %v56
  %v112 = vunpack.c.l.b16 %v57
  %v113 = vpack.c.b16 %v89, %v88
  %v114 = vpack.c.b16 %v91, %v90
  %v115 = vpack.c.b16 %v93, %v92
  %v116 = vpack.c.b16 %v95, %v94
  %v117 = vpack.c.b16 %v97, %v96
  %v118 = vpack.c.b16 %v99, %v98
  %v119 = vpack.c.b16 %v101, %v100
  %v120 = vpack.c.b16 %v103, %v102
  %v121 = vpack.c.b16 %v105, %v104
  %v122 = vpack.c.b16 %v107, %v106
  %v123 = vpack.c.b16 %v109, %v108
  %v124 = vpack.c.b16 %v111, %v110
  %v125 = vpack.c.b16 %v112, %v112
  %vm138 = vcmask 556032
  %v140 = vsel %vm138, %v32, 0
  %vm142 = vcmask 1041408
  %v144 = vsel %vm142, %v125, 0
  %146 = vmatprep.subr.bf16.mxu0 0
  %147 = vmatpush1.bf16.msra.mxu0 %v120
  %148 = vmatprep.subr.bf16.mxu0 0
  %149 = vmatpush1.bf16.msra.mxu0 %v119
  %150 = vmatprep.subr.bf16.mxu0 0
  %151 = vmatpush1.bf16.msra.mxu0 %v118
  %152 = vmatprep.subr.bf16.mxu0 0
  %153 = vmatpush1.bf16.msra.mxu0 %v117
  %154 = vmatprep.subr.bf16.mxu0 0
  %155 = vmatpush1.bf16.msra.mxu0 %v116
  %156 = vmatprep.subr.bf16.mxu0 0
  %157 = vmatpush1.bf16.msra.mxu0 %v115
  %158 = vmatprep.subr.bf16.mxu0 0
  %159 = vmatpush1.bf16.msra.mxu0 %v114
  %160 = vmatprep.subr.bf16.mxu0 0
  %161 = vmatpush1.bf16.msra.mxu0 %v113
  %162 = vmatprep.subr.bf16.mxu0 0
  %163 = vmatpush2.bf16.msra.mxu0 0
  %164 = vmatprep.subr.bf16.mxu0 0
  %165 = vmatpush2.bf16.msra.mxu0 0
  %166 = vmatprep.subr.bf16.mxu0 0
  %167 = vmatpush2.bf16.msra.mxu0 0
  %168 = vmatprep.subr.bf16.mxu0 0
  %169 = vmatpush2.bf16.msra.mxu0 %v144
  %170 = vmatprep.subr.bf16.mxu0 0
  %171 = vmatpush2.bf16.msra.mxu0 %v124
  %172 = vmatprep.subr.bf16.mxu0 0
  %173 = vmatpush2.bf16.msra.mxu0 %v123
  %174 = vmatprep.subr.bf16.mxu0 0
  %175 = vmatpush2.bf16.msra.mxu0 %v122
  %176 = vmatprep.subr.bf16.mxu0 0
  %177 = vmatpush2.bf16.msra.mxu0 %v121
  %178 = vmatprep.mubr.bf16.mxu0 %v140
  %179 = vmatmul.mubr.bf16.gmra.mxu0 %v31
  %v180 = vpop.f32.mrf.mxu0
  %v181 = vadd.f32 %v62, %v180
  %v182 = vpop.f32.mrf.mxu0
  %v183 = vpop.f32.mrf.mxu0
  %v184 = vpop.f32.mrf.mxu0
  %185 = vdwg.mxu0
  %v186 = vtanh.pop %v181
  %v187 = vld [vmem:[%s3] sm:$0xff]
  %v188 = vld [vmem:[%s3 + $0x8] sm:$0xff]
  %v189 = vld [vmem:[%s3 + $0x10] sm:$0xff]
  %v190 = vld [vmem:[%s3 + $0x18] sm:$0xff]
  %v191 = vld [vmem:[%s3 + $0x20] sm:$0xff]
  %v192 = vld [vmem:[%s3 + $0x28] sm:$0xff]
  %v193 = vld [vmem:[%s3 + $0x30] sm:$0xff]
  %v194 = vld [vmem:[%s3 + $0x38] sm:$0xff]
  %v195 = vld [vmem:[%s3 + $0x40] sm:$0xff]
  %v196 = vld [vmem:[%s3 + $0x48] sm:$0xff]
  %v197 = vld [vmem:[%s3 + $0x50] sm:$0xff]
  %v198 = vld [vmem:[%s3 + $0x58] sm:$0xff]
  %v199 = vld [vmem:[%s3 + $0x60] sm:$0xff]
  %v200 = vld [vmem:[%s3 + $0x68] sm:$0xff]
  %v201 = vld [vmem:[%s3 + $0x70] sm:$0xff]
  %v202 = vld [vmem:[%s3 + $0x78] sm:$0xff]
  %v203 = vld [vmem:[%s6 + $0x1] sm:$0x1]
  %v204 = vlaneseq
  %v205 = vshrl.u32 %v204, 7
  %v206 = vsub.s32 0, %v205
  %v207 = vrot.slane %v203, %v206
  %208 = vmatprep.subr.mxu0 0.0
  %209 = vmatpush1.msra.mxu0 %v202
  %210 = vmatprep.subr.mxu0 0.0
  %211 = vmatpush1.msra.mxu0 %v201
  %212 = vmatprep.subr.mxu0 0.0
  %213 = vmatpush1.msra.mxu0 %v200
  %214 = vmatprep.subr.mxu0 0.0
  %215 = vmatpush1.msra.mxu0 %v199
  %216 = vmatprep.subr.mxu0 0.0
  %217 = vmatpush1.msra.mxu0 %v198
  %218 = vmatprep.subr.mxu0 0.0
  %219 = vmatpush1.msra.mxu0 %v197
  %220 = vmatprep.subr.mxu0 0.0
  %221 = vmatpush1.msra.mxu0 %v196
  %222 = vmatprep.subr.mxu0 0.0
  %223 = vmatpush1.msra.mxu0 %v195
  %224 = vmatprep.subr.mxu0 0.0
  %225 = vmatpush1.msra.mxu0 %v194
  %226 = vmatprep.subr.mxu0 0.0
  %227 = vmatpush1.msra.mxu0 %v193
  %228 = vmatprep.subr.mxu0 0.0
  %229 = vmatpush1.msra.mxu0 %v192
  %230 = vmatprep.subr.mxu0 0.0
  %231 = vmatpush1.msra.mxu0 %v191
  %232 = vmatprep.subr.mxu0 0.0
  %233 = vmatpush1.msra.mxu0 %v190
  %234 = vmatprep.subr.mxu0 0.0
  %235 = vmatpush1.msra.mxu0 %v189
  %236 = vmatprep.subr.mxu0 0.0
  %237 = vmatpush1.msra.mxu0 %v188
  %238 = vmatprep.subr.mxu0 0.0
  %239 = vmatpush1.msra.mxu0 %v187
  %240 = vmatprep.subr.mxu0 0.0
  %241 = vmatpush2.msra.mxu0 0.0
  %242 = vmatprep.subr.mxu0 0.0
  %243 = vmatpush2.msra.mxu0 0.0
  %244 = vmatprep.subr.mxu0 0.0
  %245 = vmatpush2.msra.mxu0 0.0
  %246 = vmatprep.subr.mxu0 0.0
  %247 = vmatpush2.msra.mxu0 0.0
  %248 = vmatprep.subr.mxu0 0.0
  %249 = vmatpush2.msra.mxu0 0.0
  %250 = vmatprep.subr.mxu0 0.0
  %251 = vmatpush2.msra.mxu0 0.0
  %252 = vmatprep.subr.mxu0 0.0
  %253 = vmatpush2.msra.mxu0 0.0
  %254 = vmatprep.subr.mxu0 0.0
  %255 = vmatpush2.msra.mxu0 0.0
  %256 = vmatprep.subr.mxu0 0.0
  %257 = vmatpush2.msra.mxu0 0.0
  %258 = vmatprep.subr.mxu0 0.0
  %259 = vmatpush2.msra.mxu0 0.0
  %260 = vmatprep.subr.mxu0 0.0
  %261 = vmatpush2.msra.mxu0 0.0
  %262 = vmatprep.subr.mxu0 0.0
  %263 = vmatpush2.msra.mxu0 0.0
  %264 = vmatprep.subr.mxu0 0.0
  %265 = vmatpush2.msra.mxu0 0.0
  %266 = vmatprep.subr.mxu0 0.0
  %267 = vmatpush2.msra.mxu0 0.0
  %268 = vmatprep.subr.mxu0 0.0
  %269 = vmatpush2.msra.mxu0 0.0
  %270 = vmatprep.subr.mxu0 0.0
  %271 = vmatpush2.msra.mxu0 0.0
  %272 = vmatprep.mubr.f32.mxu0 0.0
  %273 = vmatmul.mubr.f32.gmra.mxu0 %v186
  %v274 = vpop.f32.mrf.mxu0
  %v275 = vadd.f32 %v207, %v274
  %v276 = vpop.f32.mrf.mxu0
  %277 = vdwg.mxu0
  %v278 = vld [vmem:[%s1] sm:$0xff]
  %v279 = vmul.f32 %v275, 0.5
  %v280 = vmul.f32 %v279, 1.442695
  %v281 = vpow.pop %v280
  %283 = vrot.lane.b32.xlu0 %v281, 120
  %v284 = vpop.permute.xlu0 %283
  %v286 = vmul.f32 %v278, %v284
  %v287 = vadd.f32 %v275, %v286
  %v288 = vpack.c.bf16 %v287, %v287
  %v289 = vld [vmem:[%s4] sm:$0xf]
  %v290 = vld [vmem:[%s6 + $0x2] sm:$0x1]
  %v291 = vlaneseq
  %v292 = vshrl.u32 %v291, 7
  %v293 = vsub.s32 0, %v292
  %v294 = vrot.slane %v290, %v293
  %vm295 = vcmask 64512
  %v297 = vsel %vm295, %v288, 0
  %vm299 = vcmask 1043456
  %v301 = vsel %vm299, %v289, 0
  %303 = vmatprep.subr.bf16.mxu0 0
  %304 = vmatpush1.bf16.msra.mxu0 0
  %305 = vmatprep.subr.bf16.mxu0 0
  %306 = vmatpush1.bf16.msra.mxu0 0
  %307 = vmatprep.subr.bf16.mxu0 0
  %308 = vmatpush1.bf16.msra.mxu0 0
  %309 = vmatprep.subr.bf16.mxu0 0
  %310 = vmatpush1.bf16.msra.mxu0 0
  %311 = vmatprep.subr.bf16.mxu0 0
  %312 = vmatpush1.bf16.msra.mxu0 0
  %313 = vmatprep.subr.bf16.mxu0 0
  %314 = vmatpush1.bf16.msra.mxu0 0
  %315 = vmatprep.subr.bf16.mxu0 0
  %316 = vmatpush1.bf16.msra.mxu0 0
  %317 = vmatprep.subr.bf16.mxu0 0
  %318 = vmatpush1.bf16.msra.mxu0 %v301
  %319 = vmatprep.subr.bf16.mxu0 0
  %320 = vmatpush2.bf16.msra.mxu0 0
  %321 = vmatprep.subr.bf16.mxu0 0
  %322 = vmatpush2.bf16.msra.mxu0 0
  %323 = vmatprep.subr.bf16.mxu0 0
  %324 = vmatpush2.bf16.msra.mxu0 0
  %325 = vmatprep.subr.bf16.mxu0 0
  %326 = vmatpush2.bf16.msra.mxu0 0
  %327 = vmatprep.subr.bf16.mxu0 0
  %328 = vmatpush2.bf16.msra.mxu0 0
  %329 = vmatprep.subr.bf16.mxu0 0
  %330 = vmatpush2.bf16.msra.mxu0 0
  %331 = vmatprep.subr.bf16.mxu0 0
  %332 = vmatpush2.bf16.msra.mxu0 0
  %333 = vmatprep.subr.bf16.mxu0 0
  %334 = vmatpush2.bf16.msra.mxu0 0
  %335 = vmatprep.mubr.bf16.mxu0 0
  %336 = vmatmul.mubr.bf16.gmra.mxu0 %v297
  %v337 = vpop.f32.mrf.mxu0
  %v338 = vadd.f32 %v294, %v337
  %v339 = vpop.f32.mrf.mxu0
  %v340 = vpop.f32.mrf.mxu0
  %v341 = vpop.f32.mrf.mxu0
  %342 = vdwg.mxu0
  %v343 = vtanh.pop %v338
  %v344 = vpack.c.bf16 %v343, %v343
  %v345 = vld [vmem:[%s5] sm:$0xff]
  %v346 = vld [vmem:[%s5 + $0x8] sm:$0xff]
  %v347 = vld [vmem:[%s5 + $0x10] sm:$0xff]
  %v348 = vld [vmem:[%s5 + $0x18] sm:$0xff]
  %v349 = vld [vmem:[%s5 + $0x20] sm:$0xff]
  %v350 = vld [vmem:[%s5 + $0x28] sm:$0xff]
  %v351 = vld [vmem:[%s5 + $0x30] sm:$0xff]
  %v352 = vld [vmem:[%s5 + $0x38] sm:$0xff]
  %v353 = vld [vmem:[%s5 + $0x40] sm:$0xff]
  %v354 = vld [vmem:[%s5 + $0x48] sm:$0xff]
  %v355 = vld [vmem:[%s5 + $0x50] sm:$0xff]
  %v356 = vld [vmem:[%s5 + $0x58] sm:$0xff]
  %v357 = vld [vmem:[%s5 + $0x60] sm:$0xff]
  %v358 = vld [vmem:[%s5 + $0x68] sm:$0xff]
  %v359 = vld [vmem:[%s5 + $0x70] sm:$0xff]
  %v360 = vld [vmem:[%s5 + $0x78] sm:$0xff]
  %s361 = scalar_lea.vmem %s6, 3
  %v362 = vld [vmem:[%s361] ss:$4 sm:$0x3]
  %v364 = vlaneseq
  %v365 = vshrl.u32 %v364, 7
  %v366 = vsub.s32 0, %v365
  %v367 = vrot.slane %v362, %v366
  %v368 = vlaneseq
  %v369 = vshrl.u32 %v368, 7
  %v370 = vsub.s32 1, %v369
  %v371 = vrot.slane %v362, %v370
  %v390 = vunpack.c.l.b16 %v345
  %v391 = vunpack.c.h.b16 %v345
  %v392 = vunpack.c.l.b16 %v346
  %v393 = vunpack.c.h.b16 %v346
  %v394 = vunpack.c.l.b16 %v347
  %v395 = vunpack.c.h.b16 %v347
  %v396 = vunpack.c.l.b16 %v348
  %v397 = vunpack.c.h.b16 %v348
  %v398 = vunpack.c.l.b16 %v349
  %v399 = vunpack.c.h.b16 %v349
  %v400 = vunpack.c.l.b16 %v350
  %v401 = vunpack.c.h.b16 %v350
  %v402 = vunpack.c.l.b16 %v351
  %v403 = vunpack.c.h.b16 %v351
  %v404 = vunpack.c.l.b16 %v352
  %v405 = vunpack.c.h.b16 %v352
  %v406 = vunpack.c.l.b16 %v353
  %v407 = vunpack.c.h.b16 %v353
  %v408 = vunpack.c.l.b16 %v354
  %v409 = vunpack.c.h.b16 %v354
  %v410 = vunpack.c.l.b16 %v355
  %v411 = vunpack.c.h.b16 %v355
  %v412 = vunpack.c.l.b16 %v356
  %v413 = vunpack.c.h.b16 %v356
  %v414 = vunpack.c.l.b16 %v357
  %v415 = vunpack.c.h.b16 %v357
  %v416 = vunpack.c.l.b16 %v358
  %v417 = vunpack.c.h.b16 %v358
  %v418 = vunpack.c.l.b16 %v359
  %v419 = vunpack.c.h.b16 %v359
  %v420 = vunpack.c.l.b16 %v360
  %v421 = vunpack.c.h.b16 %v360
  %v422 = vpack.c.b16 %v392, %v390
  %v423 = vpack.c.b16 %v393, %v391
  %v424 = vpack.c.b16 %v396, %v394
  %v425 = vpack.c.b16 %v397, %v395
  %v426 = vpack.c.b16 %v400, %v398
  %v427 = vpack.c.b16 %v401, %v399
  %v428 = vpack.c.b16 %v404, %v402
  %v429 = vpack.c.b16 %v405, %v403
  %v430 = vpack.c.b16 %v408, %v406
  %v431 = vpack.c.b16 %v409, %v407
  %v432 = vpack.c.b16 %v412, %v410
  %v433 = vpack.c.b16 %v413, %v411
  %v434 = vpack.c.b16 %v416, %v414
  %v435 = vpack.c.b16 %v417, %v415
  %v436 = vpack.c.b16 %v420, %v418
  %v437 = vpack.c.b16 %v421, %v419
  %454 = vmatprep.subr.bf16.mxu0 %v437
  %455 = vmatpush1.bf16.msra.mxu0 %v436
  %456 = vmatprep.subr.bf16.mxu0 %v435
  %457 = vmatpush1.bf16.msra.mxu0 %v434
  %458 = vmatprep.subr.bf16.mxu0 %v433
  %459 = vmatpush1.bf16.msra.mxu0 %v432
  %460 = vmatprep.subr.bf16.mxu0 %v431
  %461 = vmatpush1.bf16.msra.mxu0 %v430
  %462 = vmatprep.subr.bf16.mxu0 %v429
  %463 = vmatpush1.bf16.msra.mxu0 %v428
  %464 = vmatprep.subr.bf16.mxu0 %v427
  %465 = vmatpush1.bf16.msra.mxu0 %v426
  %466 = vmatprep.subr.bf16.mxu0 %v425
  %467 = vmatpush1.bf16.msra.mxu0 %v424
  %468 = vmatprep.subr.bf16.mxu0 %v423
  %469 = vmatpush1.bf16.msra.mxu0 %v422
  %470 = vmatprep.subr.bf16.mxu0 0
  %471 = vmatpush2.bf16.msra.mxu0 0
  %472 = vmatprep.subr.bf16.mxu0 0
  %473 = vmatpush2.bf16.msra.mxu0 0
  %474 = vmatprep.subr.bf16.mxu0 0
  %475 = vmatpush2.bf16.msra.mxu0 0
  %476 = vmatprep.subr.bf16.mxu0 0
  %477 = vmatpush2.bf16.msra.mxu0 0
  %478 = vmatprep.subr.bf16.mxu0 0
  %479 = vmatpush2.bf16.msra.mxu0 0
  %480 = vmatprep.subr.bf16.mxu0 0
  %481 = vmatpush2.bf16.msra.mxu0 0
  %482 = vmatprep.subr.bf16.mxu0 0
  %483 = vmatpush2.bf16.msra.mxu0 0
  %484 = vmatprep.subr.bf16.mxu0 0
  %485 = vmatpush2.bf16.msra.mxu0 0
  %486 = vmatprep.mubr.bf16.mxu0 0
  %487 = vmatmul.mubr.bf16.gmra.mxu0 %v344
  %v488 = vpop.f32.mrf.mxu0
  %v489 = vadd.f32 %v367, %v488
  %v490 = vpop.f32.mrf.mxu0
  %v491 = vadd.f32 %v371, %v490
  %v492 = vpop.f32.mrf.mxu0
  %v493 = vpop.f32.mrf.mxu0
  %494 = vdwg.mxu0
  %v495 = vxor.u32 %v489, 2147483648
  %v496 = vxor.u32 %v491, 2147483648
  %v497 = vmul.f32 %v495, 1.442695
  %v498 = vpow.pop %v497
  %v499 = vmul.f32 %v496, 1.442695
  %v500 = vpow.pop %v499
  %v501 = vadd.f32 %v498, 1.0
  %v502 = vadd.f32 %v500, 1.0
  %v503 = vrcp.pop %v501
  %v504 = vmul.f32 1.0, %v503
  %v505 = vrcp.pop %v502
  %v506 = vmul.f32 1.0, %v505
  %507 = vst [vmem:[%s7] sm:$0xff] %v504
  %508 = vst.msk [vmem:[%s7 + $0x8] sm:$0xff] %vm138, %v506
  %vm509 = vcmask 130048
  %510 = vst.msk [vmem:[%s8] sm:$0xff] %vm509, %v275
  // Predicated region
  $region30: #{vae_forward.1} parent=0 // pred_check
    _
  $region31: #{vae_forward.1} parent=0 // pred_check_branch
    %512 = sbr.rel (0) target = $region33
  $region32: #{vae_forward.1} parent=0 // pred_region
    _
  $region33: #{vae_forward.1} parent=0 // pred_fallthru
    _
  // Predicated region
  $region34: #{vae_forward.1} parent=0 // pred_check
    _
  $region35: #{vae_forward.1} parent=0 // pred_check_branch
    %514 = sbr.rel (0) target = $region37
  $region36: #{vae_forward.1} parent=0 // pred_region
    _
  $region37: #{vae_forward.1} parent=0 // pred_fallthru
    _
  // Predicated region
  $region38: #{vae_forward.1} parent=0 // pred_check
    _
  $region39: #{vae_forward.1} parent=0 // pred_check_branch
    %516 = sbr.rel (0) target = $region41
  $region40: #{vae_forward.1} parent=0 // pred_region
    _
  $region41: #{vae_forward.1} parent=0 // pred_fallthru
    _
  // Predicated region
  $region42: #{vae_forward.1} parent=0 // pred_check
    _
  $region43: #{vae_forward.1} parent=0 // pred_check_branch
    %518 = sbr.rel (0) target = $region45
  $region44: #{vae_forward.1} parent=0 // pred_region
    _
  $region45: #{vae_forward.1} parent=0 // pred_fallthru
    _

</llo_original>
